<compile_context>
chip_gen: v5e
topology: v5e:2x2
jax: 0.10.0
libtpu: 0.0.40
codegen_flags: <defaults>
</compile_context>

<pallas_src>
import functools

import jax
import jax.numpy as jnp
from jax.experimental import pallas as pl
from jax.experimental.pallas import tpu as pltpu


def _round_up(x: int, m: int) -> int:
    return ((x + m - 1) // m) * m


def _round_down_to(x: int, m: int) -> int:
    return max(m, (x // m) * m)


# ---------------------------------------------------------------------------
# Kernels
# ---------------------------------------------------------------------------

def _tanh_layer_single_k_kernel(x_ref, w_ref, b_ref, o_ref, *, scale):
    # x_ref: [tm, in_p] (compute dtype), w_ref: [in_p, tn] (compute dtype)
    # b_ref: [1, tn] f32, o_ref: [tm, tn].  Whole reduction in one MXU pass,
    # no scratch, no phase guards.
    y = jnp.dot(x_ref[...], w_ref[...], preferred_element_type=jnp.float32)
    y = y + b_ref[...]                      # (1, tn) broadcasts over tm
    o_ref[...] = jnp.tanh(scale * y).astype(o_ref.dtype)


def _tanh_layer_multi_k_kernel(x_ref, w_ref, b_ref, o_ref, acc_ref, *, scale):
    # General tiled-reduction path: f32 VMEM accumulator, zero-init on k==0,
    # bias + scale + tanh epilogue on the last K step.
    k = pl.program_id(2)

    @pl.when(k == 0)
    def _():
        acc_ref[...] = jnp.zeros_like(acc_ref)

    acc_ref[...] += jnp.dot(x_ref[...], w_ref[...],
                            preferred_element_type=jnp.float32)

    @pl.when(k == pl.num_programs(2) - 1)
    def _():
        y = acc_ref[...] + b_ref[...]
        o_ref[...] = jnp.tanh(scale * y).astype(o_ref.dtype)


# ---------------------------------------------------------------------------
# One-time parameter prep (hoisted out of the per-call path)
# ---------------------------------------------------------------------------

def prepare_tanh_layer_params(weight, bias, *, omega_0=30.0, is_first=False,
                              period=0.0, tn_pref=512, tk_pref=1024,
                              compute_dtype=jnp.bfloat16,
                              split_n_for_megacore=True):
    """Pad / transpose / cast the weights once; amortized over all forward calls.

    weight: [out_features, in_features] (PyTorch nn.Linear layout), f32
    bias:   [out_features], f32
    """
    out_features, in_features = weight.shape
    assert bias.shape == (out_features,)

    # Semantics of the PyTorch forward: scale by omega_0 unless
    # (period > 0 and is_first).
    scale = 1.0 if (period > 0 and is_first) else float(omega_0)

    tn_pref = _round_down_to(int(tn_pref), 128)
    tk_pref = _round_down_to(int(tk_pref), 128)

    out_p128 = _round_up(out_features, 128)
    in_p128 = _round_up(in_features, 128)

    tn = min(tn_pref, out_p128)
    if split_n_for_megacore and out_p128 >= 256:
        # Keep >= 2 N blocks so small-batch calls (single M block) still use
        # both v7x TensorCores; harmless on 1-TC chips.
        tn = min(tn, max(128, ((out_p128 // 2) // 128) * 128))
    tk = min(tk_pref, in_p128)

    out_p = _round_up(out_features, tn)
    in_p = _round_up(in_features, tk)

    w_p = weight
    if (out_p, in_p) != (out_features, in_features):
        w_p = jnp.pad(weight, ((0, out_p - out_features),
                               (0, in_p - in_features)))
    # [in_p, out_p] in compute dtype; pad + transpose + cast fuse into one copy
    # and happen once, not per forward call.
    w_t = jnp.asarray(w_p.T, dtype=compute_dtype)

    b_p = bias if out_p == out_features else jnp.pad(
        bias, (0, out_p - out_features))
    b2 = jnp.asarray(b_p, dtype=jnp.float32).reshape(1, out_p)

    return {
        "w_t": w_t, "b2": b2, "scale": scale,
        "tn": tn, "tk": tk,
        "in_features": in_features, "out_features": out_features,
        "in_p": in_p, "out_p": out_p,
        "compute_dtype": compute_dtype,
    }


# ---------------------------------------------------------------------------
# Per-call forward
# ---------------------------------------------------------------------------

def tanh_layer_apply(x, params, *, tm_pref=512):
    """Apply a prepared TanhLayer to x: tanh(scale * (x @ W^T + b))."""
    batch, in_features = x.shape
    assert in_features == params["in_features"]

    w_t, b2 = params["w_t"], params["b2"]
    scale = params["scale"]
    tn, tk = params["tn"], params["tk"]
    in_p, out_p = params["in_p"], params["out_p"]
    out_features = params["out_features"]
    compute_dtype = params["compute_dtype"]

    tm_pref = max(8, (int(tm_pref) // 8) * 8)
    tm = min(tm_pref, _round_up(batch, 8))
    batch_p = _round_up(batch, tm)

    x_p = x
    if (batch_p, in_p) != (batch, in_features):
        x_p = jnp.pad(x, ((0, batch_p - batch), (0, in_p - in_features)))
    x_p = x_p.astype(compute_dtype)

    out_dtype = x.dtype
    cb = jnp.dtype(compute_dtype).itemsize
    ob = jnp.dtype(out_dtype).itemsize

    single_k = in_p <= tk
    k_tile = in_p if single_k else tk

    # Advisory cost hint so XLA overlaps the pad/slice/cast with the kernel.
    cost = pl.CostEstimate(
        flops=2 * batch_p * out_p * in_p,
        transcendentals=batch_p * out_p,
        bytes_accessed=(x_p.size * cb + w_t.size * cb + b2.size * 4
                        + batch_p * out_p * ob),
    )

    # Double-buffered input/output tiles + (multi-K only) f32 acc scratch.
    vmem_need = 2 * (tm * k_tile * cb + k_tile * tn * cb + tn * 4
                     + tm * tn * ob)
    if not single_k:
        vmem_need += tm * tn * 4
    # Generous but v7x-safe (64 MiB physical per TensorCore).
    vmem_limit = int(min(max(2 * vmem_need, 32 * 1024 * 1024),
                         64 * 1024 * 1024))

    if single_k:
        grid = (batch_p // tm, out_p // tn)
        kernel = functools.partial(_tanh_layer_single_k_kernel, scale=scale)
        grid_spec = pltpu.PrefetchScalarGridSpec(
            num_scalar_prefetch=0,
            grid=grid,
            in_specs=[
                pl.BlockSpec((tm, in_p), lambda i, j: (i, 0)),   # x
                pl.BlockSpec((in_p, tn), lambda i, j: (0, j)),   # W^T (pre-T)
                pl.BlockSpec((1, tn), lambda i, j: (0, j)),      # bias
            ],
            out_specs=pl.BlockSpec((tm, tn), lambda i, j: (i, j)),
        )
        dims = ("parallel", "parallel")
    else:
        grid = (batch_p // tm, out_p // tn, in_p // tk)
        kernel = functools.partial(_tanh_layer_multi_k_kernel, scale=scale)
        grid_spec = pltpu.PrefetchScalarGridSpec(
            num_scalar_prefetch=0,
            grid=grid,
            in_specs=[
                pl.BlockSpec((tm, tk), lambda i, j, k: (i, k)),  # x
                pl.BlockSpec((tk, tn), lambda i, j, k: (k, j)),  # W^T (pre-T)
                pl.BlockSpec((1, tn), lambda i, j, k: (0, j)),   # bias
            ],
            out_specs=pl.BlockSpec((tm, tn), lambda i, j, k: (i, j)),
            scratch_shapes=[pltpu.VMEM((tm, tn), jnp.float32)],
        )
        dims = ("parallel", "parallel", "arbitrary")

    out_padded = pl.pallas_call(
        kernel,
        out_shape=jax.ShapeDtypeStruct((batch_p, out_p), out_dtype),
        grid_spec=grid_spec,
        compiler_params=pltpu.CompilerParams(
            dimension_semantics=dims,
            vmem_limit_bytes=vmem_limit),
        cost_estimate=cost,
    )(x_p, w_t, b2)

    if (batch_p, out_p) != (batch, out_features):
        out_padded = out_padded[:batch, :out_features]
    return out_padded


def tanh_layer(x, weight, bias, *, omega_0=30.0, is_first=False, period=0.0,
               tm_pref=512, tn_pref=512, tk_pref=1024,
               compute_dtype=jnp.bfloat16, jnp_fallback_elems=0):
    """Convenience one-shot wrapper: prep + apply.

    For repeated calls with the same layer, call prepare_tanh_layer_params once
    and tanh_layer_apply per forward.
    """
    scale = 1.0 if (period > 0 and is_first) else float(omega_0)
    batch, in_features = x.shape
    out_features = weight.shape[0]
    if batch * in_features * out_features <= jnp_fallback_elems:
        # Tiny-problem bypass (disabled by default): pure XLA beats the fixed
        # pallas_call + pad/slice overhead for micro shapes.
        return jnp.tanh(scale * (x @ weight.T + bias))
    params = prepare_tanh_layer_params(
        weight, bias, omega_0=omega_0, is_first=is_first, period=period,
        tn_pref=tn_pref, tk_pref=tk_pref, compute_dtype=compute_dtype)
    return tanh_layer_apply(x, params, tm_pref=tm_pref)


if __name__ == "__main__":
    key = jax.random.PRNGKey(0)

    # --- Test 1: small SIREN-sized layer, default bf16 datapath -------------
    batch, in_features, out_features = 8, 32, 32
    kx, kw, kb = jax.random.split(key, 3)
    bound = 1.0 / jnp.sqrt(jnp.float32(in_features))
    weight = jax.random.uniform(kw, (out_features, in_features), jnp.float32,
                                -bound, bound)
    bias = jax.random.uniform(kb, (out_features,), jnp.float32, -bound, bound)
    x = jax.random.uniform(kx, (batch, in_features), jnp.float32, -1.0, 1.0)

    out = jax.block_until_ready(
        tanh_layer(x, weight, bias, omega_0=30.0, is_first=False, period=0.0))
    assert out.shape == (batch, out_features)
    assert out.dtype == x.dtype
    # Reference with matching bf16-input / f32-accumulate numerics.
    ref_bf = jnp.tanh(30.0 * (
        jnp.dot(x.astype(jnp.bfloat16), weight.T.astype(jnp.bfloat16),
                preferred_element_type=jnp.float32) + bias))
    ref_f32 = jnp.tanh(30.0 * (x @ weight.T + bias))
    assert jnp.allclose(out, ref_bf, atol=2e-3, rtol=2e-3)
    assert jnp.allclose(out, ref_f32, atol=1e-1, rtol=1e-1)

    # --- Test 2: unaligned multi-tile, multi-K path (f32 compute, exact) ----
    b2_, fin2, fout2 = 192, 200, 150
    k2x, k2w, k2b = jax.random.split(jax.random.PRNGKey(1), 3)
    x2 = jax.random.uniform(k2x, (b2_, fin2), jnp.float32, -1.0, 1.0)
    w2 = jax.random.uniform(k2w, (fout2, fin2), jnp.float32, -0.1, 0.1)
    bb2 = jax.random.uniform(k2b, (fout2,), jnp.float32, -0.1, 0.1)

    # Hoisted one-time prep, reused across two applies with different batches.
    params2 = prepare_tanh_layer_params(
        w2, bb2, omega_0=30.0, is_first=False, period=0.0,
        tn_pref=128, tk_pref=128, compute_dtype=jnp.float32)
    out2 = jax.block_until_ready(tanh_layer_apply(x2, params2, tm_pref=128))
    ref2 = jnp.tanh(30.0 * (x2 @ w2.T + bb2))
    assert jnp.allclose(out2, ref2, atol=1e-4, rtol=1e-4)

    out2b = jax.block_until_ready(tanh_layer_apply(x2[:37], params2))
    assert jnp.allclose(out2b, ref2[:37], atol=1e-4, rtol=1e-4)

    # --- Test 3: first-layer / period>0 semantics (no omega_0 scaling) ------
    out3 = jax.block_until_ready(
        tanh_layer(x, weight, bias, omega_0=30.0, is_first=True, period=1.0))
    ref3_bf = jnp.tanh(
        jnp.dot(x.astype(jnp.bfloat16), weight.T.astype(jnp.bfloat16),
                preferred_element_type=jnp.float32) + bias)
    assert jnp.allclose(out3, ref3_bf, atol=2e-3, rtol=2e-3)

    print("KERNEL_OK")
</pallas_src>

<mosaic_0001>
module attributes {stable_mosaic.version = 11 : i64} {
  func.func @_tanh_layer_single_k_kernel(%arg0: i32, %arg1: i32, %arg2: memref<8x128xbf16, #tpu.memory_space<vmem>>, %arg3: memref<128x128xbf16, #tpu.memory_space<vmem>>, %arg4: memref<1x128xf32, #tpu.memory_space<vmem>>, %arg5: memref<8x128xf32, #tpu.memory_space<vmem>>) attributes {dimension_semantics = [#tpu.dimension_semantics<parallel>, #tpu.dimension_semantics<parallel>], iteration_bounds = array<i64: 1, 1>, scalar_prefetch = 0 : i64, scratch_operands = 0 : i64, tpu.core_type = #tpu.core_type<tc>, window_params = [{transform_indices = @transform_0, window_bounds = array<i64: 8, 128>}, {transform_indices = @transform_1, window_bounds = array<i64: 128, 128>}, {transform_indices = @transform_2, window_bounds = array<i64: 1, 128>}, {transform_indices = @transform_3, window_bounds = array<i64: 8, 128>}]} {
    %c0 = arith.constant 0 : index
    %c0_0 = arith.constant 0 : index
    %0 = vector.load %arg2[%c0, %c0_0] : memref<8x128xbf16, #tpu.memory_space<vmem>>, vector<8x128xbf16>
    %c0_1 = arith.constant 0 : index
    %c0_2 = arith.constant 0 : index
    %1 = vector.load %arg3[%c0_1, %c0_2] : memref<128x128xbf16, #tpu.memory_space<vmem>>, vector<128x128xbf16>
    %cst = arith.constant dense<0.000000e+00> : vector<8x128xf32>
    %2 = tpu.matmul %0, %1, %cst {dimension_numbers = #tpu.dot_dimension_numbers<[1], [0], [0], [1], [0, 0, 1, 1], [], []>} : vector<8x128xbf16>, vector<128x128xbf16>, vector<8x128xf32> -> vector<8x128xf32>
    %c0_3 = arith.constant 0 : index
    %c0_4 = arith.constant 0 : index
    %3 = vector.load %arg4[%c0_3, %c0_4] : memref<1x128xf32, #tpu.memory_space<vmem>>, vector<1x128xf32>
    %4 = vector.broadcast %3 : vector<1x128xf32> to vector<8x128xf32>
    %5 = arith.addf %2, %4 : vector<8x128xf32>
    %cst_5 = arith.constant 3.000000e+01 : f32
    %6 = vector.broadcast %cst_5 : f32 to vector<8x128xf32>
    %7 = arith.mulf %6, %5 : vector<8x128xf32>
    %8 = math.tanh %7 : vector<8x128xf32>
    %c0_6 = arith.constant 0 : index
    %c0_7 = arith.constant 0 : index
    %9 = vector.load %arg5[%c0_6, %c0_7] : memref<8x128xf32, #tpu.memory_space<vmem>>, vector<8x128xf32>
    tpu.vector_store %arg5[%c0_6, %c0_7], %8 {strides = array<i32>} : memref<8x128xf32, #tpu.memory_space<vmem>>, vector<8x128xf32>,
    return
  }
  func.func @transform_0(%arg0: i32, %arg1: i32) -> (i32, i32) {
    %c0_i32 = arith.constant 0 : i32
    %c0_i32_0 = arith.constant 0 : i32
    return %arg0, %c0_i32 : i32, i32
  }
  func.func @transform_1(%arg0: i32, %arg1: i32) -> (i32, i32) {
    %c0_i32 = arith.constant 0 : i32
    %c0_i32_0 = arith.constant 0 : i32
    return %c0_i32, %arg1 : i32, i32
  }
  func.func @transform_2(%arg0: i32, %arg1: i32) -> (i32, i32) {
    %c0_i32 = arith.constant 0 : i32
    %c0_i32_0 = arith.constant 0 : i32
    return %c0_i32, %arg1 : i32, i32
  }
  func.func @transform_3(%arg0: i32, %arg1: i32) -> (i32, i32) {
    %c0_i32 = arith.constant 0 : i32
    return %arg0, %arg1 : i32, i32
  }
}

</mosaic_0001>

<llo_original>
// kernel: tpu_custom_call.1
$region0: #{tpu_custom_call.1}
  #allocation0 [shape = 'u32[]', space=smem, size = 0x4, offset = 0x4, fixed_abs, tag = 'smem constant byte address 0x4 - core index']
  #allocation1 [shape = 'u32[72,128]{1,0:T(1,128)}', space=vmem, size = 0x9000, scoped, tag = 'internal scratch']
  %s0 = inlined_call_operand.hbm [shape: bf16[8,128], index: 0, kind: input, shape index: {}]
  %s1 = inlined_call_operand.hbm [shape: bf16[128,128], index: 1, kind: input, shape index: {}]
  %s2 = inlined_call_operand.vmem [shape: f32[1,128], index: 2, kind: input, shape index: {}]
  %s3 = inlined_call_operand.hbm [shape: f32[8,128], index: 3, kind: output, shape index: {}]
  %s4 = sld [smem:[#allocation0]]
  $region30: #{tpu_custom_call.1} parent=0
    _
  %s6 = ssub.s32 1, %s4
  %s7 = scalar_select 0, %s6, %s4
  $region1: #{tpu_custom_call.1} parent=0
    #allocation2 [shape = 'u8[2048]{0}', space=vmem, size = 0x800, scoped, tag = 'input window, operand 0, single buffered']
    #allocation3 [shape = 's32[1]{0}', space=sflag, size = 0x4, scoped, tag = 'scoped memory for tpu_custom_call.1']
    #allocation4 [shape = 's32[1]{0}', space=sflag, size = 0x4, scoped, tag = 'scoped memory for tpu_custom_call.1']
    #allocation5 [shape = 'u8[32768]{0}', space=vmem, size = 0x8000, scoped, tag = 'input window, operand 1, single buffered']
    #allocation6 [shape = 's32[1]{0}', space=sflag, size = 0x4, scoped, tag = 'scoped memory for tpu_custom_call.1']
    #allocation7 [shape = 'u8[4096]{0}', space=vmem, size = 0x1000, scoped, tag = 'output window, operand 0, single buffered']
    %8 = vsyncpa [#allocation3], 0
    %9 = vsyncpa [#allocation6], 0
    %10 = vsyncpa [#allocation4], 0
    // Predicated region
    $region2: #{tpu_custom_call.1} parent=1 // pred_check
      _
    $region3: #{tpu_custom_call.1} parent=1 // pred_check_branch
      %12 = sbr.rel (0) target = $region5
    $region4: #{tpu_custom_call.1} parent=1 // pred_region
      %14 = vsyncadd [#allocation3], 0
      %s16 = sshll.u32 %s0, 4
      %s17 = int_to_ptr.hbm [resolvable:$true] %s16
      %s18 = sshll.u32 [#allocation2], 4
      %s19 = int_to_ptr.vmem [resolvable:$true] %s18
      %21 = dma.hbm_to_vmem [thread:$0]  %s17, 64, %s19, [#allocation3]
    $region5: #{tpu_custom_call.1} parent=1 // pred_fallthru
      _
    // Predicated region
    $region6: #{tpu_custom_call.1} parent=1 // pred_check
      _
    $region7: #{tpu_custom_call.1} parent=1 // pred_check_branch
      %23 = sbr.rel (0) target = $region9
    $region8: #{tpu_custom_call.1} parent=1 // pred_region
      %25 = vsyncadd [#allocation6], 0
      %s26 = sshll.u32 %s1, 4
      %s27 = int_to_ptr.hbm [resolvable:$true] %s26
      %s28 = sshll.u32 [#allocation5], 4
      %s29 = int_to_ptr.vmem [resolvable:$true] %s28
      %34 = dma.hbm_to_vmem [thread:$0]  %s27, 1024, %s29, [#allocation6], 64, 64, 4
    $region9: #{tpu_custom_call.1} parent=1 // pred_fallthru
      _
    // Predicated region
    $region10: #{tpu_custom_call.1} parent=1 // pred_check
      _
    $region11: #{tpu_custom_call.1} parent=1 // pred_check_branch
      %36 = sbr.rel (0) target = $region13
    $region12: #{tpu_custom_call.1} parent=1 // pred_region
      _
    $region13: #{tpu_custom_call.1} parent=1 // pred_fallthru
      _
    // Predicated region
    $region14: #{tpu_custom_call.1} parent=1 // pred_check
      _
    $region15: #{tpu_custom_call.1} parent=1 // pred_check_branch
      %38 = sbr.rel (0) target = $region17
    $region16: #{tpu_custom_call.1} parent=1 // pred_region
      %40 = dma.done [#allocation3], 64
    $region17: #{tpu_custom_call.1} parent=1 // pred_fallthru
      _
    // Predicated region
    $region18: #{tpu_custom_call.1} parent=1 // pred_check
      _
    $region19: #{tpu_custom_call.1} parent=1 // pred_check_branch
      %42 = sbr.rel (0) target = $region21
    $region20: #{tpu_custom_call.1} parent=1 // pred_region
      %44 = dma.done [#allocation6], 1024
    $region21: #{tpu_custom_call.1} parent=1 // pred_fallthru
      _
    %v45 = vld [vmem:[#allocation2] sm:$0xf]
    %v46 = vld [vmem:[#allocation5] sm:$0xf]
    %v47 = vld [vmem:[#allocation5 + $0x4] sm:$0xf]
    %v48 = vld [vmem:[#allocation5 + $0x8] sm:$0xf]
    %v49 = vld [vmem:[#allocation5 + $0xc] sm:$0xf]
    %v50 = vld [vmem:[#allocation5 + $0x10] sm:$0xf]
    %v51 = vld [vmem:[#allocation5 + $0x14] sm:$0xf]
    %v52 = vld [vmem:[#allocation5 + $0x18] sm:$0xf]
    %v53 = vld [vmem:[#allocation5 + $0x1c] sm:$0xf]
    %v54 = vld [vmem:[#allocation5 + $0x20] sm:$0xf]
    %v55 = vld [vmem:[#allocation5 + $0x24] sm:$0xf]
    %v56 = vld [vmem:[#allocation5 + $0x28] sm:$0xf]
    %v57 = vld [vmem:[#allocation5 + $0x2c] sm:$0xf]
    %v58 = vld [vmem:[#allocation5 + $0x30] sm:$0xf]
    %v59 = vld [vmem:[#allocation5 + $0x34] sm:$0xf]
    %v60 = vld [vmem:[#allocation5 + $0x38] sm:$0xf]
    %v61 = vld [vmem:[#allocation5 + $0x3c] sm:$0xf]
    %v62 = vld [vmem:[%s2] sm:$0x1]
    %v64 = vperm.slane %v62, 0
    %v82 = vunpack.c.l.b16 %v46
    %v83 = vunpack.c.l.b16 %v47
    %v84 = vunpack.c.l.b16 %v48
    %v85 = vunpack.c.l.b16 %v49
    %v86 = vunpack.c.l.b16 %v50
    %v87 = vunpack.c.l.b16 %v51
    %v88 = vunpack.c.l.b16 %v52
    %v89 = vunpack.c.l.b16 %v53
    %v90 = vunpack.c.l.b16 %v54
    %v91 = vunpack.c.l.b16 %v55
    %v92 = vunpack.c.l.b16 %v56
    %v93 = vunpack.c.l.b16 %v57
    %v94 = vunpack.c.l.b16 %v58
    %v95 = vunpack.c.l.b16 %v59
    %v96 = vunpack.c.l.b16 %v60
    %v97 = vunpack.c.l.b16 %v61
    %v98 = vpack.c.b16 %v83, %v82
    %v99 = vpack.c.b16 %v85, %v84
    %v100 = vpack.c.b16 %v87, %v86
    %v101 = vpack.c.b16 %v89, %v88
    %v102 = vpack.c.b16 %v91, %v90
    %v103 = vpack.c.b16 %v93, %v92
    %v104 = vpack.c.b16 %v95, %v94
    %v105 = vpack.c.b16 %v97, %v96
    %114 = vmatpush.bf16.msra.mxu0 %v105
    %115 = vmatpush.bf16.msra.mxu0 %v104
    %116 = vmatpush.bf16.msra.mxu0 %v103
    %117 = vmatpush.bf16.msra.mxu0 %v102
    %118 = vmatpush.bf16.msra.mxu0 %v101
    %119 = vmatpush.bf16.msra.mxu0 %v100
    %120 = vmatpush.bf16.msra.mxu0 %v99
    %121 = vmatpush.bf16.msra.mxu0 %v98
    %122 = vmatmul.bf16.gmra.mxu0 %v45
    %v123 = vpop.f32.mrf.mxu0
    %v124 = vadd.f32 %v64, %v123
    %v125 = vpop.f32.mrf.mxu0
    %126 = vdwg.mxu0
    %v127 = vmul.f32 %v124, 30.0
    %v128 = vtanh.pop %v127
    %129 = vst [vmem:[#allocation7] sm:$0xff] %v128
    // Predicated region
    $region22: #{tpu_custom_call.1} parent=1 // pred_check
      _
    $region23: #{tpu_custom_call.1} parent=1 // pred_check_branch
      %131 = sbr.rel (0) target = $region25
    $region24: #{tpu_custom_call.1} parent=1 // pred_region
      %133 = vsyncadd [#allocation4], 0
      %s135 = sshll.u32 [#allocation7], 4
      %s136 = int_to_ptr.vmem [resolvable:$true] %s135
      %s137 = sshll.u32 %s3, 4
      %s138 = int_to_ptr.hbm [resolvable:$true] %s137
      %140 = dma.vmem_to_hbm [thread:$0]  %s136, 128, %s138, [#allocation4]
    $region25: #{tpu_custom_call.1} parent=1 // pred_fallthru
      _
    // Predicated region
    $region26: #{tpu_custom_call.1} parent=1 // pred_check
      _
    $region27: #{tpu_custom_call.1} parent=1 // pred_check_branch
      %142 = sbr.rel (0) target = $region29
    $region28: #{tpu_custom_call.1} parent=1 // pred_region
      %144 = dma.done [#allocation4], 128
    $region29: #{tpu_custom_call.1} parent=1 // pred_fallthru
      _
    %145 = vsyncpa [#allocation3], 1
    %146 = vsyncpa [#allocation6], 1
    %147 = vsyncpa [#allocation4], 1

</llo_original>
